<compile_context>
chip_gen: v7x
topology: tpu7x:2x2x1
jax: 0.10.0
libtpu: 0.0.40
codegen_flags: <defaults>
</compile_context>

<pallas_src>
import math

import jax
import jax.numpy as jnp
from jax.experimental import pallas as pl
from jax.experimental.pallas import tpu as pltpu


def _fused_equivariant_linear_kernel(w_ref, pw_ref, pb_ref, b_ref, x_ref,
                                     o_ref, w_acc):
    """One grid step of the fused forward.

    Shapes seen by the kernel:
      w_ref : (1, 1, tk)          flattened-weight tile (lane-dense row)
      pw_ref: (n_out, n_in, tk)   Pw rows grouped by output entry (o, i), k-tile in lanes
      pb_ref: (n_out, n_out)      bias projector (constant index -> resident)
      b_ref : (1, n_out)          raw bias row
      x_ref : (B, n_in)           input batch (constant index -> resident)
      o_ref : (B, n_out)          output, written on the last k step only
      w_acc : (n_out, n_in) f32   VMEM scratch accumulating the projected W
    """
    k = pl.program_id(0)
    nk = pl.num_programs(0)

    # Partial equivariant projection of the weight for this k-tile:
    #   contrib[o, i] = sum_{kk in tile} Pw[o*n_in + i, kk] * vec(w)[kk]
    contrib = jnp.sum(pw_ref[...] * w_ref[...], axis=-1)  # (n_out, n_in), f32

    @pl.when(k == 0)
    def _init():
        w_acc[...] = contrib

    @pl.when(k > 0)
    def _accumulate():
        w_acc[...] = w_acc[...] + contrib

    @pl.when(k == nk - 1)
    def _epilogue():
        # b_proj[0, o] = sum_j Pb[o, j] * b[j]  == (Pb @ b)[o]
        b_proj = jax.lax.dot_general(
            b_ref[...], pb_ref[...],
            dimension_numbers=(((1,), (1,)), ((), ())),
            preferred_element_type=jnp.float32,
        )
        # y = x @ W.T  (contract n_in with n_in, f32 accumulation on the MXU)
        y = jax.lax.dot_general(
            x_ref[...], w_acc[...],
            dimension_numbers=(((1,), (1,)), ((), ())),
            preferred_element_type=jnp.float32,
        )
        o_ref[...] = (y + b_proj).astype(o_ref.dtype)


def equivariant_linear_forward(x, w, b, Pw, Pb, *, tk=None):
    """y = x @ ((Pw @ vec(w)).reshape(n_out, n_in)).T + Pb @ b, fused on TPU."""
    batch, n_in = x.shape
    n_out, n_in2 = w.shape
    assert n_in == n_in2
    K = n_out * n_in
    assert Pw.shape == (K, K) and Pb.shape == (n_out, n_out) and b.shape == (n_out,)

    # Reduction tile over the flattened-weight axis (lane dimension of Pw tiles).
    if tk is None:
        tk = 128 if K % 128 == 0 else K
    assert K % tk == 0
    num_k = K // tk

    w_row = w.reshape(1, 1, K)         # lane-dense flattened weight (not a (K,1) column)
    pw3 = Pw.reshape(n_out, n_in, K)   # Pw rows grouped by output entry (o, i)
    b_row = b.reshape(1, n_out)

    return pl.pallas_call(
        _fused_equivariant_linear_kernel,
        out_shape=jax.ShapeDtypeStruct((batch, n_out), x.dtype),
        grid=(num_k,),
        in_specs=[
            pl.BlockSpec((1, 1, tk), lambda k: (0, 0, k)),          # vec(w) tile
            pl.BlockSpec((n_out, n_in, tk), lambda k: (0, 0, k)),   # Pw tile (streamed)
            pl.BlockSpec((n_out, n_out), lambda k: (0, 0)),         # Pb (resident)
            pl.BlockSpec((1, n_out), lambda k: (0, 0)),             # raw bias (resident)
            pl.BlockSpec((batch, n_in), lambda k: (0, 0)),          # x (resident)
        ],
        out_specs=pl.BlockSpec((batch, n_out), lambda k: (0, 0)),
        scratch_shapes=[pltpu.VMEM((n_out, n_in), jnp.float32)],
        compiler_params=pltpu.CompilerParams(
            dimension_semantics=("arbitrary",),  # reduction over vec(w)
        ),
    )(w_row, pw3, Pb, b_row, x)


# ----------------------------------------------------------------------------
# Synthetic parameter / projector construction (plain JAX, outside the kernel)
# ----------------------------------------------------------------------------
def _orthogonal_projector(key, dim, rank):
    """Deterministic symmetric idempotent projector P = Q @ Q.T (Q from QR)."""
    a = jax.random.normal(key, (dim, rank), dtype=jnp.float32)
    q, _ = jnp.linalg.qr(a)
    return q @ q.T


def _orthogonal_init(key, shape):
    """Row-orthonormal weight init (analogue of nn.init.orthogonal_)."""
    return jax.nn.initializers.orthogonal()(key, shape, jnp.float32)


if __name__ == "__main__":
    # Small shapes consistent with the module: x @ W.T with W (n_out, n_in).
    batch, n_in, n_out = 8, 32, 16

    key = jax.random.PRNGKey(0)
    k_x, k_w, k_b, k_pw, k_pb = jax.random.split(key, 5)

    x = jax.random.normal(k_x, (batch, n_in), dtype=jnp.float32)
    w = _orthogonal_init(k_w, (n_out, n_in))
    b = jax.random.uniform(k_b, (n_out,), dtype=jnp.float32) / math.sqrt(n_out)

    # Synthetic equivariant projectors (real ones come from the Rep algebra).
    Pw = _orthogonal_projector(k_pw, n_out * n_in, (n_out * n_in) // 2)
    Pb = _orthogonal_projector(k_pb, n_out, n_out // 2)

    y = equivariant_linear_forward(x, w, b, Pw, Pb)
    y = jax.block_until_ready(y)

    # Reference check in plain JAX (same math as the PyTorch forward).
    W_expected = (Pw @ w.reshape(-1)).reshape(n_out, n_in)
    b_expected = Pb @ b
    y_expected = x @ W_expected.T + b_expected
    assert y.shape == (batch, n_out)
    assert jnp.allclose(y, y_expected, atol=1e-4, rtol=1e-4)

    print("KERNEL_OK")
</pallas_src>

<mosaic_0001>
module attributes {stable_mosaic.version = 11 : i64} {
  func.func @_fused_equivariant_linear_kernel(%arg0: i32, %arg1: memref<1x1x128xf32, #tpu.memory_space<vmem>>, %arg2: memref<16x32x128xf32, #tpu.memory_space<vmem>>, %arg3: memref<16x16xf32, #tpu.memory_space<vmem>>, %arg4: memref<1x16xf32, #tpu.memory_space<vmem>>, %arg5: memref<8x32xf32, #tpu.memory_space<vmem>>, %arg6: memref<8x16xf32, #tpu.memory_space<vmem>>, %arg7: memref<16x32xf32, #tpu.memory_space<vmem>>) attributes {dimension_semantics = [#tpu.dimension_semantics<arbitrary>], iteration_bounds = array<i64: 4>, scalar_prefetch = 0 : i64, scratch_operands = 1 : i64, tpu.core_type = #tpu.core_type<tc>, window_params = [{transform_indices = @transform_0, window_bounds = array<i64: 1, 1, 128>}, {transform_indices = @transform_1, window_bounds = array<i64: 16, 32, 128>}, {pipeline_mode = #tpu.pipeline_mode<synchronous>, transform_indices = @transform_2, window_bounds = array<i64: 16, 16>}, {pipeline_mode = #tpu.pipeline_mode<synchronous>, transform_indices = @transform_3, window_bounds = array<i64: 1, 16>}, {pipeline_mode = #tpu.pipeline_mode<synchronous>, transform_indices = @transform_4, window_bounds = array<i64: 8, 32>}, {pipeline_mode = #tpu.pipeline_mode<synchronous>, transform_indices = @transform_5, window_bounds = array<i64: 8, 16>}]} {
    %c0 = arith.constant 0 : index
    %c0_0 = arith.constant 0 : index
    %c0_1 = arith.constant 0 : index
    %0 = vector.load %arg2[%c0, %c0_0, %c0_1] : memref<16x32x128xf32, #tpu.memory_space<vmem>>, vector<16x32x128xf32>
    %c0_2 = arith.constant 0 : index
    %c0_3 = arith.constant 0 : index
    %c0_4 = arith.constant 0 : index
    %1 = vector.load %arg1[%c0_2, %c0_3, %c0_4] : memref<1x1x128xf32, #tpu.memory_space<vmem>>, vector<1x1x128xf32>
    %2 = vector.broadcast %1 : vector<1x1x128xf32> to vector<16x32x128xf32>
    %3 = arith.mulf %0, %2 : vector<16x32x128xf32>
    %cst = arith.constant dense<0.000000e+00> : vector<16x32xf32>
    %4 = vector.multi_reduction <add>, %3, %cst [2] : vector<16x32x128xf32> to vector<16x32xf32>
    %c0_i32 = arith.constant 0 : i32
    %5 = arith.cmpi eq, %arg0, %c0_i32 : i32
    %6 = arith.extui %5 : i1 to i32
    %c0_i32_5 = arith.constant 0 : i32
    %7 = arith.cmpi ne, %6, %c0_i32_5 : i32
    scf.if %7 {
      %c0_9 = arith.constant 0 : index
      %c0_10 = arith.constant 0 : index
      %14 = vector.load %arg7[%c0_9, %c0_10] : memref<16x32xf32, #tpu.memory_space<vmem>>, vector<16x32xf32>
      tpu.vector_store %arg7[%c0_9, %c0_10], %4 {strides = array<i32>} : memref<16x32xf32, #tpu.memory_space<vmem>>, vector<16x32xf32>,
    } else {
    }
    %c0_i32_6 = arith.constant 0 : i32
    %8 = arith.cmpi sgt, %arg0, %c0_i32_6 : i32
    %9 = arith.extui %8 : i1 to i32
    %c0_i32_7 = arith.constant 0 : i32
    %10 = arith.cmpi ne, %9, %c0_i32_7 : i32
    scf.if %10 {
      %c0_9 = arith.constant 0 : index
      %c0_10 = arith.constant 0 : index
      %14 = vector.load %arg7[%c0_9, %c0_10] : memref<16x32xf32, #tpu.memory_space<vmem>>, vector<16x32xf32>
      %15 = arith.addf %14, %4 : vector<16x32xf32>
      %c0_11 = arith.constant 0 : index
      %c0_12 = arith.constant 0 : index
      %16 = vector.load %arg7[%c0_11, %c0_12] : memref<16x32xf32, #tpu.memory_space<vmem>>, vector<16x32xf32>
      tpu.vector_store %arg7[%c0_11, %c0_12], %15 {strides = array<i32>} : memref<16x32xf32, #tpu.memory_space<vmem>>, vector<16x32xf32>,
    } else {
    }
    %c3_i32 = arith.constant 3 : i32
    %11 = arith.cmpi eq, %arg0, %c3_i32 : i32
    %12 = arith.extui %11 : i1 to i32
    %c0_i32_8 = arith.constant 0 : i32
    %13 = arith.cmpi ne, %12, %c0_i32_8 : i32
    scf.if %13 {
      %c0_9 = arith.constant 0 : index
      %c0_10 = arith.constant 0 : index
      %14 = vector.load %arg4[%c0_9, %c0_10] : memref<1x16xf32, #tpu.memory_space<vmem>>, vector<1x16xf32>
      %c0_11 = arith.constant 0 : index
      %c0_12 = arith.constant 0 : index
      %15 = vector.load %arg3[%c0_11, %c0_12] : memref<16x16xf32, #tpu.memory_space<vmem>>, vector<16x16xf32>
      %cst_13 = arith.constant dense<0.000000e+00> : vector<1x16xf32>
      %16 = tpu.matmul %14, %15, %cst_13 {dimension_numbers = #tpu.dot_dimension_numbers<[1], [1], [0], [0], [0, 0, 1, 0], [], []>} : vector<1x16xf32>, vector<16x16xf32>, vector<1x16xf32> -> vector<1x16xf32>
      %c0_14 = arith.constant 0 : index
      %c0_15 = arith.constant 0 : index
      %17 = vector.load %arg5[%c0_14, %c0_15] : memref<8x32xf32, #tpu.memory_space<vmem>>, vector<8x32xf32>
      %c0_16 = arith.constant 0 : index
      %c0_17 = arith.constant 0 : index
      %18 = vector.load %arg7[%c0_16, %c0_17] : memref<16x32xf32, #tpu.memory_space<vmem>>, vector<16x32xf32>
      %cst_18 = arith.constant dense<0.000000e+00> : vector<8x16xf32>
      %19 = tpu.matmul %17, %18, %cst_18 {dimension_numbers = #tpu.dot_dimension_numbers<[1], [1], [0], [0], [0, 0, 1, 0], [], []>} : vector<8x32xf32>, vector<16x32xf32>, vector<8x16xf32> -> vector<8x16xf32>
      %20 = vector.broadcast %16 : vector<1x16xf32> to vector<8x16xf32>
      %21 = arith.addf %19, %20 : vector<8x16xf32>
      %c0_19 = arith.constant 0 : index
      %c0_20 = arith.constant 0 : index
      %22 = vector.load %arg6[%c0_19, %c0_20] : memref<8x16xf32, #tpu.memory_space<vmem>>, vector<8x16xf32>
      tpu.vector_store %arg6[%c0_19, %c0_20], %21 {strides = array<i32>} : memref<8x16xf32, #tpu.memory_space<vmem>>, vector<8x16xf32>,
    } else {
    }
    return
  }
  func.func @transform_0(%arg0: i32) -> (i32, i32, i32) {
    %c0_i32 = arith.constant 0 : i32
    %c0_i32_0 = arith.constant 0 : i32
    %c0_i32_1 = arith.constant 0 : i32
    return %c0_i32, %c0_i32_0, %arg0 : i32, i32, i32
  }
  func.func @transform_1(%arg0: i32) -> (i32, i32, i32) {
    %c0_i32 = arith.constant 0 : i32
    %c0_i32_0 = arith.constant 0 : i32
    %c0_i32_1 = arith.constant 0 : i32
    return %c0_i32, %c0_i32_0, %arg0 : i32, i32, i32
  }
  func.func @transform_2(%arg0: i32) -> (i32, i32) {
    %c0_i32 = arith.constant 0 : i32
    %c0_i32_0 = arith.constant 0 : i32
    %c0_i32_1 = arith.constant 0 : i32
    return %c0_i32, %c0_i32_0 : i32, i32
  }
  func.func @transform_3(%arg0: i32) -> (i32, i32) {
    %c0_i32 = arith.constant 0 : i32
    %c0_i32_0 = arith.constant 0 : i32
    %c0_i32_1 = arith.constant 0 : i32
    return %c0_i32, %c0_i32_0 : i32, i32
  }
  func.func @transform_4(%arg0: i32) -> (i32, i32) {
    %c0_i32 = arith.constant 0 : i32
    %c0_i32_0 = arith.constant 0 : i32
    %c0_i32_1 = arith.constant 0 : i32
    return %c0_i32, %c0_i32_0 : i32, i32
  }
  func.func @transform_5(%arg0: i32) -> (i32, i32) {
    %c0_i32 = arith.constant 0 : i32
    %c0_i32_0 = arith.constant 0 : i32
    %c0_i32_1 = arith.constant 0 : i32
    return %c0_i32, %c0_i32_0 : i32, i32
  }
}

</mosaic_0001>

<llo_original>
// kernel: tpu_custom_call.1
$region0: #{tpu_custom_call.1}
  #allocation0 [shape = 'u32[]', space=smem, size = 0x4, offset = 0x4, fixed_abs, tag = 'smem constant byte address 0x4 - core index']
  #allocation1 [shape = 'u32[144,128]{1,0:T(1,128)}', space=vmem, size = 0x12000, scoped, tag = 'internal scratch']
  #allocation2 [shape = 'f32[16,32]{1,0:T(8,128)}', space=vmem, size = 0x2000, scoped, tag = 'scratch operand']
  %s0 = inlined_call_operand.hbm [shape: f32[1,1,512], index: 0, kind: input, shape index: {}]
  %s1 = inlined_call_operand.hbm [shape: f32[16,32,512], index: 1, kind: input, shape index: {}]
  %s2 = inlined_call_operand.hbm [shape: f32[16,16], index: 2, kind: input, shape index: {}]
  %s3 = inlined_call_operand.vmem [shape: f32[1,16], index: 3, kind: input, shape index: {}]
  %s4 = inlined_call_operand.vmem [shape: f32[8,32], index: 4, kind: input, shape index: {}]
  %s5 = inlined_call_operand.hbm [shape: f32[8,16], index: 5, kind: output, shape index: {}]
  %s6 = sld [smem:[#allocation0]]
  $region77: #{tpu_custom_call.1} parent=0
    _
  %s8 = ssub.s32 1, %s6
  %s9 = scalar_select 0, %s8, %s6
  $region1: #{tpu_custom_call.1} parent=0
    #allocation3 [shape = 'u8[1024]{0}', space=vmem, size = 0x400, scoped, tag = 'input window, operand 0']
    #allocation4 [shape = 's32[2]{0}', space=sflag, size = 0x8, scoped, tag = 'scoped memory for tpu_custom_call.1']
    #allocation5 [shape = 's32[2]{0}', space=sflag, size = 0x8, scoped, tag = 'scoped memory for tpu_custom_call.1']
    #allocation6 [shape = 'u8[524288]{0}', space=vmem, size = 0x80000, scoped, tag = 'input window, operand 1']
    #allocation7 [shape = 's32[2]{0}', space=sflag, size = 0x8, scoped, tag = 'scoped memory for tpu_custom_call.1']
    #allocation8 [shape = 'u8[8192]{0}', space=vmem, size = 0x2000, scoped, tag = 'input window, operand 2, single buffered']
    #allocation9 [shape = 'u8[4096]{0}', space=vmem, size = 0x1000, scoped, tag = 'output window, operand 0, single buffered']
    %10 = vsyncpa [#allocation4], 0
    %s11 = scalar_lea.sflag [#allocation4], 1
    %12 = vsyncpa %s11, 0
    %13 = vsyncpa [#allocation7], 0
    %s14 = scalar_lea.sflag [#allocation7], 1
    %15 = vsyncpa %s14, 0
    %16 = vsyncpa [#allocation5], 0
    loop: start=0, step=1, limit=6
    $region2: #{tpu_custom_call.1} parent=1 // loop_pre_header
      _
    $region3: #{tpu_custom_call.1} parent=1 // loop_header
      %s18 = sphi 0, %s22
      %p19 = scmp.ge.s32.totalorder %s18, 6
      %s28 = sphi 0, %s30
      %s31 = sphi 0, %s28
      %s32 = sphi 0, %s31
      %s48 = sphi 0, %s32
      %s54 = sphi 0, %s56
      %s57 = sphi 0, %s54
      %s58 = sphi 0, %s57
      %s74 = sphi 0, %s58
      %s78 = sphi 0, %s78
      %s80 = sphi 0, %s78
      %s81 = sphi 0, %s80
      %s95 = sphi 0, %s81
      %s99 = sphi 0, %s99
      %s101 = sphi 0, %s99
      %s102 = sphi 0, %s101
      %s116 = sphi 0, %s102
      %s120 = sphi 0, %s120
      %s122 = sphi 0, %s120
      %s123 = sphi 0, %s122
      %s137 = sphi 0, %s123
      %s141 = sphi 0, %s141
      %s143 = sphi 0, %s141
      %s144 = sphi 0, %s143
      %s158 = sphi 0, %s144
    $region4: #{tpu_custom_call.1} parent=1 // loop_header_branch
      %21 = sbr.rel (%p19) target = $region8
    $region5: #{tpu_custom_call.1} parent=1 // loop_body
      %s23 = ssub.s32 %s18, 1
      %s24 = ssub.s32 %s18, 2
      %s25 = sadd.s32 %s18, 1
      %s26 = ssub.s32 %s18, %s25
      %p27 = scmp.eq.s32.totalorder %s26, 0
      %s29 = sadd.s32 %s28, 1
      %s30 = scalar_select %p27, %s28, %s29
      %p33 = pneg %p27
      %p34 = scmp.eq.s32.totalorder %s18, 3
      %p35 = por %p33, %p34
      %p36 = scmp.ne.s32.totalorder %s28, %s31
      %p37 = scmp.eq.s32.totalorder %s18, 0
      %p38 = por %p36, %p37
      %p39 = scmp.ne.s32.totalorder %s28, %s31
      %p40 = scmp.eq.s32.totalorder %s23, 3
      %p41 = por %p39, %p40
      %p42 = scmp.ne.s32.totalorder %s31, %s32
      %p43 = scmp.eq.s32.totalorder %s23, 0
      %p44 = por %p42, %p43
      %p45 = scmp.ne.s32.totalorder %s31, %s32
      %p46 = scmp.eq.s32.totalorder %s24, 3
      %p47 = por %p45, %p46
      %p49 = scmp.ne.s32.totalorder %s32, %s48
      %p50 = scmp.eq.s32.totalorder %s24, 0
      %p51 = por %p49, %p50
      %s52 = ssub.s32 %s18, %s25
      %p53 = scmp.eq.s32.totalorder %s52, 0
      %s55 = sadd.s32 %s54, 1
      %s56 = scalar_select %p53, %s54, %s55
      %p59 = pneg %p53
      %p60 = scmp.eq.s32.totalorder %s18, 3
      %p61 = por %p59, %p60
      %p62 = scmp.ne.s32.totalorder %s54, %s57
      %p63 = scmp.eq.s32.totalorder %s18, 0
      %p64 = por %p62, %p63
      %p65 = scmp.ne.s32.totalorder %s54, %s57
      %p66 = scmp.eq.s32.totalorder %s23, 3
      %p67 = por %p65, %p66
      %p68 = scmp.ne.s32.totalorder %s57, %s58
      %p69 = scmp.eq.s32.totalorder %s23, 0
      %p70 = por %p68, %p69
      %p71 = scmp.ne.s32.totalorder %s57, %s58
      %p72 = scmp.eq.s32.totalorder %s24, 3
      %p73 = por %p71, %p72
      %p75 = scmp.ne.s32.totalorder %s58, %s74
      %p76 = scmp.eq.s32.totalorder %s24, 0
      %p77 = por %p75, %p76
      %s79 = sadd.s32 %s78, 1
      %p82 = scmp.eq.s32.totalorder %s18, 3
      %p83 = scmp.ne.s32.totalorder %s78, %s80
      %p84 = scmp.eq.s32.totalorder %s18, 0
      %p85 = por %p83, %p84
      %p86 = scmp.ne.s32.totalorder %s78, %s80
      %p87 = scmp.eq.s32.totalorder %s23, 3
      %p88 = por %p86, %p87
      %p89 = scmp.ne.s32.totalorder %s80, %s81
      %p90 = scmp.eq.s32.totalorder %s23, 0
      %p91 = por %p89, %p90
      %p92 = scmp.ne.s32.totalorder %s80, %s81
      %p93 = scmp.eq.s32.totalorder %s24, 3
      %p94 = por %p92, %p93
      %p96 = scmp.ne.s32.totalorder %s81, %s95
      %p97 = scmp.eq.s32.totalorder %s24, 0
      %p98 = por %p96, %p97
      %s100 = sadd.s32 %s99, 1
      %p103 = scmp.eq.s32.totalorder %s18, 3
      %p104 = scmp.ne.s32.totalorder %s99, %s101
      %p105 = scmp.eq.s32.totalorder %s18, 0
      %p106 = por %p104, %p105
      %p107 = scmp.ne.s32.totalorder %s99, %s101
      %p108 = scmp.eq.s32.totalorder %s23, 3
      %p109 = por %p107, %p108
      %p110 = scmp.ne.s32.totalorder %s101, %s102
      %p111 = scmp.eq.s32.totalorder %s23, 0
      %p112 = por %p110, %p111
      %p113 = scmp.ne.s32.totalorder %s101, %s102
      %p114 = scmp.eq.s32.totalorder %s24, 3
      %p115 = por %p113, %p114
      %p117 = scmp.ne.s32.totalorder %s102, %s116
      %p118 = scmp.eq.s32.totalorder %s24, 0
      %p119 = por %p117, %p118
      %s121 = sadd.s32 %s120, 1
      %p124 = scmp.eq.s32.totalorder %s18, 3
      %p125 = scmp.ne.s32.totalorder %s120, %s122
      %p126 = scmp.eq.s32.totalorder %s18, 0
      %p127 = por %p125, %p126
      %p128 = scmp.ne.s32.totalorder %s120, %s122
      %p129 = scmp.eq.s32.totalorder %s23, 3
      %p130 = por %p128, %p129
      %p131 = scmp.ne.s32.totalorder %s122, %s123
      %p132 = scmp.eq.s32.totalorder %s23, 0
      %p133 = por %p131, %p132
      %p134 = scmp.ne.s32.totalorder %s122, %s123
      %p135 = scmp.eq.s32.totalorder %s24, 3
      %p136 = por %p134, %p135
      %p138 = scmp.ne.s32.totalorder %s123, %s137
      %p139 = scmp.eq.s32.totalorder %s24, 0
      %p140 = por %p138, %p139
      %s142 = sadd.s32 %s141, 1
      %p145 = scmp.eq.s32.totalorder %s18, 3
      %p146 = scmp.ne.s32.totalorder %s141, %s143
      %p147 = scmp.eq.s32.totalorder %s18, 0
      %p148 = por %p146, %p147
      %p149 = scmp.ne.s32.totalorder %s141, %s143
      %p150 = scmp.eq.s32.totalorder %s23, 3
      %p151 = por %p149, %p150
      %p152 = scmp.ne.s32.totalorder %s143, %s144
      %p153 = scmp.eq.s32.totalorder %s23, 0
      %p154 = por %p152, %p153
      %p155 = scmp.ne.s32.totalorder %s143, %s144
      %p156 = scmp.eq.s32.totalorder %s24, 3
      %p157 = por %p155, %p156
      %p159 = scmp.ne.s32.totalorder %s144, %s158
      %p160 = scmp.eq.s32.totalorder %s24, 0
      %p161 = por %p159, %p160
      %p162 = scmp.le.s32.totalorder 1, %s18
      %p163 = scmp.lt.s32.totalorder %s18, 5
      %p164 = pnand %p162, %p163
      %p165 = pneg %p164
      // Predicated region
      $region9: #{tpu_custom_call.1} parent=5 // pred_check
        _
      $region10: #{tpu_custom_call.1} parent=5 // pred_check_branch
        %167 = sbr.rel (%p164) target = $region12
      $region11: #{tpu_custom_call.1} parent=5 // pred_region
        %s168 = ssub.s32 %s18, 1
        // Predicated region
        $region13: #{tpu_custom_call.1} parent=11 // pred_check
          %p169 = pneg %p91
        $region14: #{tpu_custom_call.1} parent=11 // pred_check_branch
          %171 = sbr.rel (%p169) target = $region16
        $region15: #{tpu_custom_call.1} parent=11 // pred_region
          %s173 = ssub.s32 256, 256
          %174 = vsyncadd [#allocation7], %s173
          %s175 = sshll.u32 [#allocation8], 4
          %s176 = int_to_ptr.vmem [resolvable:$true] %s175
          %181 = dma.hbm_to_vmem [thread:$0]  %s2, 256, %s176, [#allocation7], 128, 128, 8
        $region16: #{tpu_custom_call.1} parent=11 // pred_fallthru
          _
        // Predicated region
        $region17: #{tpu_custom_call.1} parent=11 // pred_check
          %p182 = pneg %p112
        $region18: #{tpu_custom_call.1} parent=11 // pred_check_branch
          %184 = sbr.rel (%p182) target = $region20
        $region19: #{tpu_custom_call.1} parent=11 // pred_region
          _
        $region20: #{tpu_custom_call.1} parent=11 // pred_fallthru
          _
        // Predicated region
        $region21: #{tpu_custom_call.1} parent=11 // pred_check
          %p185 = pneg %p133
        $region22: #{tpu_custom_call.1} parent=11 // pred_check_branch
          %187 = sbr.rel (%p185) target = $region24
        $region23: #{tpu_custom_call.1} parent=11 // pred_region
          _
        $region24: #{tpu_custom_call.1} parent=11 // pred_fallthru
          _
      $region12: #{tpu_custom_call.1} parent=5 // pred_fallthru
        _
      %p188 = scmp.lt.s32.totalorder %s18, 4
      // Predicated region
      $region25: #{tpu_custom_call.1} parent=5 // pred_check
        %p189 = pneg %p188
      $region26: #{tpu_custom_call.1} parent=5 // pred_check_branch
        %191 = sbr.rel (%p189) target = $region28
      $region27: #{tpu_custom_call.1} parent=5 // pred_region
        // Predicated region
        $region29: #{tpu_custom_call.1} parent=27 // pred_check
          %p192 = pneg %p38
        $region30: #{tpu_custom_call.1} parent=27 // pred_check_branch
          %194 = sbr.rel (%p192) target = $region32
        $region31: #{tpu_custom_call.1} parent=27 // pred_region
          %s195 = sand.u32 %s28, 1
          %s196 = scalar_lea.sflag [#allocation4], %s195
          %s197 = sand.u32 %s28, 1
          %s198 = scalar_lea.vmem [#allocation3], %s197
          %s200 = ssub.s32 16, 16
          %201 = vsyncadd %s196, %s200
          %s202 = smul.addr %s18, 16
          %s203 = scalar_lea.hbm %s0, %s202
          %s205 = sshll.u32 %s198, 4
          %s206 = int_to_ptr.vmem [resolvable:$true] %s205
          %208 = dma.hbm_to_vmem [thread:$0]  %s203, 16, %s206, %s196
        $region32: #{tpu_custom_call.1} parent=27 // pred_fallthru
          _
        // Predicated region
        $region33: #{tpu_custom_call.1} parent=27 // pred_check
          %p209 = pneg %p64
        $region34: #{tpu_custom_call.1} parent=27 // pred_check_branch
          %211 = sbr.rel (%p209) target = $region36
        $region35: #{tpu_custom_call.1} parent=27 // pred_region
          %s212 = sand.u32 %s18, 1
          %s213 = scalar_lea.sflag [#allocation7], %s212
          %s214 = sand.u32 %s54, 1
          %s215 = smul.addr %s214, 512
          %s216 = scalar_lea.vmem [#allocation6], %s215
          %s218 = ssub.s32 8192, 8192
          %219 = vsyncadd %s213, %s218
          %s220 = smul.addr %s18, 128
          %s221 = scalar_lea.hbm %s1, %s220
          %s222 = sshll.u32 %s216, 4
          %s223 = int_to_ptr.vmem [resolvable:$true] %s222
          %228 = dma.hbm_to_vmem [thread:$0]  %s221, 8192, %s223, %s213, 512, 128, 8
        $region36: #{tpu_custom_call.1} parent=27 // pred_fallthru
          _
      $region28: #{tpu_custom_call.1} parent=5 // pred_fallthru
        _
      %p229 = scmp.le.s32.totalorder 1, %s18
      %p230 = scmp.lt.s32.totalorder %s18, 5
      %p231 = pnand %p229, %p230
      %p232 = pneg %p231
      // Predicated region
      $region37: #{tpu_custom_call.1} parent=5 // pred_check
        _
      $region38: #{tpu_custom_call.1} parent=5 // pred_check_branch
        %234 = sbr.rel (%p231) target = $region40
      $region39: #{tpu_custom_call.1} parent=5 // pred_region
        %s235 = ssub.s32 %s18, 1
        %s236 = sand.u32 %s31, 1
        %s237 = scalar_lea.sflag [#allocation4], %s236
        %s238 = sand.u32 %s31, 1
        %s239 = scalar_lea.vmem [#allocation3], %s238
        // Predicated region
        $region41: #{tpu_custom_call.1} parent=39 // pred_check
          %p240 = pneg %p44
        $region42: #{tpu_custom_call.1} parent=39 // pred_check_branch
          %242 = sbr.rel (%p240) target = $region44
        $region43: #{tpu_custom_call.1} parent=39 // pred_region
          %243 = dma.done %s237, 16
        $region44: #{tpu_custom_call.1} parent=39 // pred_fallthru
          _
        %s244 = sand.u32 %s23, 1
        %s245 = scalar_lea.sflag [#allocation7], %s244
        %s246 = sand.u32 %s57, 1
        %s247 = smul.addr %s246, 512
        %s248 = scalar_lea.vmem [#allocation6], %s247
        // Predicated region
        $region45: #{tpu_custom_call.1} parent=39 // pred_check
          %p249 = pneg %p70
        $region46: #{tpu_custom_call.1} parent=39 // pred_check_branch
          %251 = sbr.rel (%p249) target = $region48
        $region47: #{tpu_custom_call.1} parent=39 // pred_region
          %252 = dma.done %s245, 8192
        $region48: #{tpu_custom_call.1} parent=39 // pred_fallthru
          _
        // Predicated region
        $region49: #{tpu_custom_call.1} parent=39 // pred_check
          %p253 = pneg %p91
        $region50: #{tpu_custom_call.1} parent=39 // pred_check_branch
          %255 = sbr.rel (%p253) target = $region52
        $region51: #{tpu_custom_call.1} parent=39 // pred_region
          %256 = dma.done [#allocation7], 256
        $region52: #{tpu_custom_call.1} parent=39 // pred_fallthru
          _
        %s257 = sand.u32 %s31, 1
        %s258 = scalar_lea.sflag [#allocation4], %s257
        %s259 = sand.u32 %s31, 1
        %s260 = scalar_lea.vmem [#allocation3], %s259
        %p261 = pneg %p44
        %p262 = pneg %p41
        %s263 = sand.u32 %s23, 1
        %s264 = scalar_lea.sflag [#allocation7], %s263
        %s265 = sand.u32 %s57, 1
        %s266 = smul.addr %s265, 512
        %s267 = scalar_lea.vmem [#allocation6], %s266
        %p268 = pneg %p70
        %p269 = pneg %p67
        %p270 = pneg %p91
        %p271 = pneg %p88
        %p272 = pneg %p112
        %p273 = pneg %p109
        %p274 = pneg %p133
        %p275 = pneg %p130
        %p276 = pneg %p154
        %p277 = pneg %p151
        %v278 = vld [vmem:[%s248] sm:$0xff]
        %v279 = vld [vmem:[%s248 + $0x8] sm:$0xff]
        %v280 = vld [vmem:[%s248 + $0x10] sm:$0xff]
        %v281 = vld [vmem:[%s248 + $0x18] sm:$0xff]
        %v282 = vld [vmem:[%s248 + $0x20] sm:$0xff]
        %v283 = vld [vmem:[%s248 + $0x28] sm:$0xff]
        %v284 = vld [vmem:[%s248 + $0x30] sm:$0xff]
        %v285 = vld [vmem:[%s248 + $0x38] sm:$0xff]
        %v286 = vld [vmem:[%s248 + $0x40] sm:$0xff]
        %v287 = vld [vmem:[%s248 + $0x48] sm:$0xff]
        %v288 = vld [vmem:[%s248 + $0x50] sm:$0xff]
        %v289 = vld [vmem:[%s248 + $0x58] sm:$0xff]
        %v290 = vld [vmem:[%s248 + $0x60] sm:$0xff]
        %v291 = vld [vmem:[%s248 + $0x68] sm:$0xff]
        %v292 = vld [vmem:[%s248 + $0x70] sm:$0xff]
        %v293 = vld [vmem:[%s248 + $0x78] sm:$0xff]
        %v294 = vld [vmem:[%s248 + $0x80] sm:$0xff]
        %v295 = vld [vmem:[%s248 + $0x88] sm:$0xff]
        %v296 = vld [vmem:[%s248 + $0x90] sm:$0xff]
        %v297 = vld [vmem:[%s248 + $0x98] sm:$0xff]
        %v298 = vld [vmem:[%s248 + $0xa0] sm:$0xff]
        %v299 = vld [vmem:[%s248 + $0xa8] sm:$0xff]
        %v300 = vld [vmem:[%s248 + $0xb0] sm:$0xff]
        %v301 = vld [vmem:[%s248 + $0xb8] sm:$0xff]
        %v302 = vld [vmem:[%s248 + $0xc0] sm:$0xff]
        %v303 = vld [vmem:[%s248 + $0xc8] sm:$0xff]
        %v304 = vld [vmem:[%s248 + $0xd0] sm:$0xff]
        %v305 = vld [vmem:[%s248 + $0xd8] sm:$0xff]
        %v306 = vld [vmem:[%s248 + $0xe0] sm:$0xff]
        %v307 = vld [vmem:[%s248 + $0xe8] sm:$0xff]
        %v308 = vld [vmem:[%s248 + $0xf0] sm:$0xff]
        %v309 = vld [vmem:[%s248 + $0xf8] sm:$0xff]
        %v310 = vld [vmem:[%s248 + $0x100] sm:$0xff]
        %v311 = vld [vmem:[%s248 + $0x108] sm:$0xff]
        %v312 = vld [vmem:[%s248 + $0x110] sm:$0xff]
        %v313 = vld [vmem:[%s248 + $0x118] sm:$0xff]
        %v314 = vld [vmem:[%s248 + $0x120] sm:$0xff]
        %v315 = vld [vmem:[%s248 + $0x128] sm:$0xff]
        %v316 = vld [vmem:[%s248 + $0x130] sm:$0xff]
        %v317 = vld [vmem:[%s248 + $0x138] sm:$0xff]
        %v318 = vld [vmem:[%s248 + $0x140] sm:$0xff]
        %v319 = vld [vmem:[%s248 + $0x148] sm:$0xff]
        %v320 = vld [vmem:[%s248 + $0x150] sm:$0xff]
        %v321 = vld [vmem:[%s248 + $0x158] sm:$0xff]
        %v322 = vld [vmem:[%s248 + $0x160] sm:$0xff]
        %v323 = vld [vmem:[%s248 + $0x168] sm:$0xff]
        %v324 = vld [vmem:[%s248 + $0x170] sm:$0xff]
        %v325 = vld [vmem:[%s248 + $0x178] sm:$0xff]
        %v326 = vld [vmem:[%s248 + $0x180] sm:$0xff]
        %v327 = vld [vmem:[%s248 + $0x188] sm:$0xff]
        %v328 = vld [vmem:[%s248 + $0x190] sm:$0xff]
        %v329 = vld [vmem:[%s248 + $0x198] sm:$0xff]
        %v330 = vld [vmem:[%s248 + $0x1a0] sm:$0xff]
        %v331 = vld [vmem:[%s248 + $0x1a8] sm:$0xff]
        %v332 = vld [vmem:[%s248 + $0x1b0] sm:$0xff]
        %v333 = vld [vmem:[%s248 + $0x1b8] sm:$0xff]
        %v334 = vld [vmem:[%s248 + $0x1c0] sm:$0xff]
        %v335 = vld [vmem:[%s248 + $0x1c8] sm:$0xff]
        %v336 = vld [vmem:[%s248 + $0x1d0] sm:$0xff]
        %v337 = vld [vmem:[%s248 + $0x1d8] sm:$0xff]
        %v338 = vld [vmem:[%s248 + $0x1e0] sm:$0xff]
        %v339 = vld [vmem:[%s248 + $0x1e8] sm:$0xff]
        %v340 = vld [vmem:[%s248 + $0x1f0] sm:$0xff]
        %v341 = vld [vmem:[%s248 + $0x1f8] sm:$0xff]
        %v342 = vld [vmem:[%s239] sm:$0x1]
        %v344 = vlaneseq
        %v345 = vshrl.u32 %v344, 7
        %v346 = vsub.s32 0, %v345
        %v347 = vrot.slane %v342, %v346
        %v349 = vmul.f32 %v278, %v347
        %v350 = vmul.f32 %v279, %v347
        %v351 = vmul.f32 %v280, %v347
        %v352 = vmul.f32 %v281, %v347
        %v353 = vmul.f32 %v282, %v347
        %v354 = vmul.f32 %v283, %v347
        %v355 = vmul.f32 %v284, %v347
        %v356 = vmul.f32 %v285, %v347
        %v357 = vmul.f32 %v286, %v347
        %v358 = vmul.f32 %v287, %v347
        %v359 = vmul.f32 %v288, %v347
        %v360 = vmul.f32 %v289, %v347
        %v361 = vmul.f32 %v290, %v347
        %v362 = vmul.f32 %v291, %v347
        %v363 = vmul.f32 %v292, %v347
        %v364 = vmul.f32 %v293, %v347
        %v365 = vmul.f32 %v294, %v347
        %v366 = vmul.f32 %v295, %v347
        %v367 = vmul.f32 %v296, %v347
        %v368 = vmul.f32 %v297, %v347
        %v369 = vmul.f32 %v298, %v347
        %v370 = vmul.f32 %v299, %v347
        %v371 = vmul.f32 %v300, %v347
        %v372 = vmul.f32 %v301, %v347
        %v373 = vmul.f32 %v302, %v347
        %v374 = vmul.f32 %v303, %v347
        %v375 = vmul.f32 %v304, %v347
        %v376 = vmul.f32 %v305, %v347
        %v377 = vmul.f32 %v306, %v347
        %v378 = vmul.f32 %v307, %v347
        %v379 = vmul.f32 %v308, %v347
        %v380 = vmul.f32 %v309, %v347
        %v381 = vmul.f32 %v310, %v347
        %v382 = vmul.f32 %v311, %v347
        %v383 = vmul.f32 %v312, %v347
        %v384 = vmul.f32 %v313, %v347
        %v385 = vmul.f32 %v314, %v347
        %v386 = vmul.f32 %v315, %v347
        %v387 = vmul.f32 %v316, %v347
        %v388 = vmul.f32 %v317, %v347
        %v389 = vmul.f32 %v318, %v347
        %v390 = vmul.f32 %v319, %v347
        %v391 = vmul.f32 %v320, %v347
        %v392 = vmul.f32 %v321, %v347
        %v393 = vmul.f32 %v322, %v347
        %v394 = vmul.f32 %v323, %v347
        %v395 = vmul.f32 %v324, %v347
        %v396 = vmul.f32 %v325, %v347
        %v397 = vmul.f32 %v326, %v347
        %v398 = vmul.f32 %v327, %v347
        %v399 = vmul.f32 %v328, %v347
        %v400 = vmul.f32 %v329, %v347
        %v401 = vmul.f32 %v330, %v347
        %v402 = vmul.f32 %v331, %v347
        %v403 = vmul.f32 %v332, %v347
        %v404 = vmul.f32 %v333, %v347
        %v405 = vmul.f32 %v334, %v347
        %v406 = vmul.f32 %v335, %v347
        %v407 = vmul.f32 %v336, %v347
        %v408 = vmul.f32 %v337, %v347
        %v409 = vmul.f32 %v338, %v347
        %v410 = vmul.f32 %v339, %v347
        %v411 = vmul.f32 %v340, %v347
        %v412 = vmul.f32 %v341, %v347
        %413 = vadd.xlane.f32.xlu0 %v349
        %v414 = vpop.xlane.xlu0 %413
        %415 = vadd.xlane.f32.xlu0 %v350
        %v416 = vpop.xlane.xlu0 %415
        %417 = vadd.xlane.f32.xlu0 %v351
        %v418 = vpop.xlane.xlu0 %417
        %419 = vadd.xlane.f32.xlu0 %v352
        %v420 = vpop.xlane.xlu0 %419
        %421 = vadd.xlane.f32.xlu0 %v353
        %v422 = vpop.xlane.xlu0 %421
        %423 = vadd.xlane.f32.xlu0 %v354
        %v424 = vpop.xlane.xlu0 %423
        %425 = vadd.xlane.f32.xlu0 %v355
        %v426 = vpop.xlane.xlu0 %425
        %427 = vadd.xlane.f32.xlu0 %v356
        %v428 = vpop.xlane.xlu0 %427
        %429 = vadd.xlane.f32.xlu0 %v357
        %v430 = vpop.xlane.xlu0 %429
        %431 = vadd.xlane.f32.xlu0 %v358
        %v432 = vpop.xlane.xlu0 %431
        %433 = vadd.xlane.f32.xlu0 %v359
        %v434 = vpop.xlane.xlu0 %433
        %435 = vadd.xlane.f32.xlu0 %v360
        %v436 = vpop.xlane.xlu0 %435
        %437 = vadd.xlane.f32.xlu0 %v361
        %v438 = vpop.xlane.xlu0 %437
        %439 = vadd.xlane.f32.xlu0 %v362
        %v440 = vpop.xlane.xlu0 %439
        %441 = vadd.xlane.f32.xlu0 %v363
        %v442 = vpop.xlane.xlu0 %441
        %443 = vadd.xlane.f32.xlu0 %v364
        %v444 = vpop.xlane.xlu0 %443
        %445 = vadd.xlane.f32.xlu0 %v365
        %v446 = vpop.xlane.xlu0 %445
        %447 = vadd.xlane.f32.xlu0 %v366
        %v448 = vpop.xlane.xlu0 %447
        %449 = vadd.xlane.f32.xlu0 %v367
        %v450 = vpop.xlane.xlu0 %449
        %451 = vadd.xlane.f32.xlu0 %v368
        %v452 = vpop.xlane.xlu0 %451
        %453 = vadd.xlane.f32.xlu0 %v369
        %v454 = vpop.xlane.xlu0 %453
        %455 = vadd.xlane.f32.xlu0 %v370
        %v456 = vpop.xlane.xlu0 %455
        %457 = vadd.xlane.f32.xlu0 %v371
        %v458 = vpop.xlane.xlu0 %457
        %459 = vadd.xlane.f32.xlu0 %v372
        %v460 = vpop.xlane.xlu0 %459
        %461 = vadd.xlane.f32.xlu0 %v373
        %v462 = vpop.xlane.xlu0 %461
        %463 = vadd.xlane.f32.xlu0 %v374
        %v464 = vpop.xlane.xlu0 %463
        %465 = vadd.xlane.f32.xlu0 %v375
        %v466 = vpop.xlane.xlu0 %465
        %467 = vadd.xlane.f32.xlu0 %v376
        %v468 = vpop.xlane.xlu0 %467
        %469 = vadd.xlane.f32.xlu0 %v377
        %v470 = vpop.xlane.xlu0 %469
        %471 = vadd.xlane.f32.xlu0 %v378
        %v472 = vpop.xlane.xlu0 %471
        %473 = vadd.xlane.f32.xlu0 %v379
        %v474 = vpop.xlane.xlu0 %473
        %475 = vadd.xlane.f32.xlu0 %v380
        %v476 = vpop.xlane.xlu0 %475
        %477 = vadd.xlane.f32.xlu0 %v381
        %v478 = vpop.xlane.xlu0 %477
        %479 = vadd.xlane.f32.xlu0 %v382
        %v480 = vpop.xlane.xlu0 %479
        %481 = vadd.xlane.f32.xlu0 %v383
        %v482 = vpop.xlane.xlu0 %481
        %483 = vadd.xlane.f32.xlu0 %v384
        %v484 = vpop.xlane.xlu0 %483
        %485 = vadd.xlane.f32.xlu0 %v385
        %v486 = vpop.xlane.xlu0 %485
        %487 = vadd.xlane.f32.xlu0 %v386
        %v488 = vpop.xlane.xlu0 %487
        %489 = vadd.xlane.f32.xlu0 %v387
        %v490 = vpop.xlane.xlu0 %489
        %491 = vadd.xlane.f32.xlu0 %v388
        %v492 = vpop.xlane.xlu0 %491
        %493 = vadd.xlane.f32.xlu0 %v389
        %v494 = vpop.xlane.xlu0 %493
        %495 = vadd.xlane.f32.xlu0 %v390
        %v496 = vpop.xlane.xlu0 %495
        %497 = vadd.xlane.f32.xlu0 %v391
        %v498 = vpop.xlane.xlu0 %497
        %499 = vadd.xlane.f32.xlu0 %v392
        %v500 = vpop.xlane.xlu0 %499
        %501 = vadd.xlane.f32.xlu0 %v393
        %v502 = vpop.xlane.xlu0 %501
        %503 = vadd.xlane.f32.xlu0 %v394
        %v504 = vpop.xlane.xlu0 %503
        %505 = vadd.xlane.f32.xlu0 %v395
        %v506 = vpop.xlane.xlu0 %505
        %507 = vadd.xlane.f32.xlu0 %v396
        %v508 = vpop.xlane.xlu0 %507
        %509 = vadd.xlane.f32.xlu0 %v397
        %v510 = vpop.xlane.xlu0 %509
        %511 = vadd.xlane.f32.xlu0 %v398
        %v512 = vpop.xlane.xlu0 %511
        %513 = vadd.xlane.f32.xlu0 %v399
        %v514 = vpop.xlane.xlu0 %513
        %515 = vadd.xlane.f32.xlu0 %v400
        %v516 = vpop.xlane.xlu0 %515
        %517 = vadd.xlane.f32.xlu0 %v401
        %v518 = vpop.xlane.xlu0 %517
        %519 = vadd.xlane.f32.xlu0 %v402
        %v520 = vpop.xlane.xlu0 %519
        %521 = vadd.xlane.f32.xlu0 %v403
        %v522 = vpop.xlane.xlu0 %521
        %523 = vadd.xlane.f32.xlu0 %v404
        %v524 = vpop.xlane.xlu0 %523
        %525 = vadd.xlane.f32.xlu0 %v405
        %v526 = vpop.xlane.xlu0 %525
        %527 = vadd.xlane.f32.xlu0 %v406
        %v528 = vpop.xlane.xlu0 %527
        %529 = vadd.xlane.f32.xlu0 %v407
        %v530 = vpop.xlane.xlu0 %529
        %531 = vadd.xlane.f32.xlu0 %v408
        %v532 = vpop.xlane.xlu0 %531
        %533 = vadd.xlane.f32.xlu0 %v409
        %v534 = vpop.xlane.xlu0 %533
        %535 = vadd.xlane.f32.xlu0 %v410
        %v536 = vpop.xlane.xlu0 %535
        %537 = vadd.xlane.f32.xlu0 %v411
        %v538 = vpop.xlane.xlu0 %537
        %539 = vadd.xlane.f32.xlu0 %v412
        %v540 = vpop.xlane.xlu0 %539
        %p541 = scmp.eq.s32.totalorder %s23, 0
        // Predicated region
        $region53: #{tpu_custom_call.1} parent=39 // pred_check
          %p542 = pneg %p541
        $region54: #{tpu_custom_call.1} parent=39 // pred_check_branch
          %544 = sbr.rel (%p542) target = $region56
        $region55: #{tpu_custom_call.1} parent=39 // pred_region
          %v609 = vlaneseq
          %v610 = vand.u32 %v609, 127
          %v611 = vlaneseq
          %v612 = vshrl.u32 %v611, 7
          %v613 = vsub.s32 %v610, %v612
          %v614 = vrot.slane %v414, %v613
          %v615 = vadd.s32 %v610, 4294967288
          %v616 = vlaneseq
          %v617 = vshrl.u32 %v616, 7
          %v618 = vsub.s32 %v615, %v617
          %v619 = vrot.slane %v416, %v618
          %vm620 = vcmask 130112
          %v621 = vsel %vm620, %v619, %v614
          %v622 = vadd.s32 %v610, 4294967280
          %v623 = vlaneseq
          %v624 = vshrl.u32 %v623, 7
          %v625 = vsub.s32 %v622, %v624
          %v626 = vrot.slane %v418, %v625
          %vm627 = vcmask 195712
          %v628 = vsel %vm627, %v626, %v621
          %v629 = vadd.s32 %v610, 4294967272
          %v630 = vlaneseq
          %v631 = vshrl.u32 %v630, 7
          %v632 = vsub.s32 %v629, %v631
          %v633 = vrot.slane %v420, %v632
          %vm634 = vcmask 261312
          %v635 = vsel %vm634, %v633, %v628
          %v636 = vlaneseq
          %v637 = vshrl.u32 %v636, 7
          %v638 = vsub.s32 %v610, %v637
          %v639 = vrot.slane %v422, %v638
          %v640 = vlaneseq
          %v641 = vshrl.u32 %v640, 7
          %v642 = vsub.s32 %v615, %v641
          %v643 = vrot.slane %v424, %v642
          %v644 = vsel %vm620, %v643, %v639
          %v645 = vlaneseq
          %v646 = vshrl.u32 %v645, 7
          %v647 = vsub.s32 %v622, %v646
          %v648 = vrot.slane %v426, %v647
          %v649 = vsel %vm627, %v648, %v644
          %v650 = vlaneseq
          %v651 = vshrl.u32 %v650, 7
          %v652 = vsub.s32 %v629, %v651
          %v653 = vrot.slane %v428, %v652
          %v654 = vsel %vm634, %v653, %v649
          %v655 = vlaneseq
          %v656 = vshrl.u32 %v655, 7
          %v657 = vsub.s32 %v610, %v656
          %v658 = vrot.slane %v430, %v657
          %v659 = vlaneseq
          %v660 = vshrl.u32 %v659, 7
          %v661 = vsub.s32 %v615, %v660
          %v662 = vrot.slane %v432, %v661
          %v663 = vsel %vm620, %v662, %v658
          %v664 = vlaneseq
          %v665 = vshrl.u32 %v664, 7
          %v666 = vsub.s32 %v622, %v665
          %v667 = vrot.slane %v434, %v666
          %v668 = vsel %vm627, %v667, %v663
          %v669 = vlaneseq
          %v670 = vshrl.u32 %v669, 7
          %v671 = vsub.s32 %v629, %v670
          %v672 = vrot.slane %v436, %v671
          %v673 = vsel %vm634, %v672, %v668
          %v674 = vlaneseq
          %v675 = vshrl.u32 %v674, 7
          %v676 = vsub.s32 %v610, %v675
          %v677 = vrot.slane %v438, %v676
          %v678 = vlaneseq
          %v679 = vshrl.u32 %v678, 7
          %v680 = vsub.s32 %v615, %v679
          %v681 = vrot.slane %v440, %v680
          %v682 = vsel %vm620, %v681, %v677
          %v683 = vlaneseq
          %v684 = vshrl.u32 %v683, 7
          %v685 = vsub.s32 %v622, %v684
          %v686 = vrot.slane %v442, %v685
          %v687 = vsel %vm627, %v686, %v682
          %v688 = vlaneseq
          %v689 = vshrl.u32 %v688, 7
          %v690 = vsub.s32 %v629, %v689
          %v691 = vrot.slane %v444, %v690
          %v692 = vsel %vm634, %v691, %v687
          %v693 = vlaneseq
          %v694 = vshrl.u32 %v693, 7
          %v695 = vsub.s32 %v610, %v694
          %v696 = vrot.slane %v446, %v695
          %v697 = vlaneseq
          %v698 = vshrl.u32 %v697, 7
          %v699 = vsub.s32 %v615, %v698
          %v700 = vrot.slane %v448, %v699
          %v701 = vsel %vm620, %v700, %v696
          %v702 = vlaneseq
          %v703 = vshrl.u32 %v702, 7
          %v704 = vsub.s32 %v622, %v703
          %v705 = vrot.slane %v450, %v704
          %v706 = vsel %vm627, %v705, %v701
          %v707 = vlaneseq
          %v708 = vshrl.u32 %v707, 7
          %v709 = vsub.s32 %v629, %v708
          %v710 = vrot.slane %v452, %v709
          %v711 = vsel %vm634, %v710, %v706
          %v712 = vlaneseq
          %v713 = vshrl.u32 %v712, 7
          %v714 = vsub.s32 %v610, %v713
          %v715 = vrot.slane %v454, %v714
          %v716 = vlaneseq
          %v717 = vshrl.u32 %v716, 7
          %v718 = vsub.s32 %v615, %v717
          %v719 = vrot.slane %v456, %v718
          %v720 = vsel %vm620, %v719, %v715
          %v721 = vlaneseq
          %v722 = vshrl.u32 %v721, 7
          %v723 = vsub.s32 %v622, %v722
          %v724 = vrot.slane %v458, %v723
          %v725 = vsel %vm627, %v724, %v720
          %v726 = vlaneseq
          %v727 = vshrl.u32 %v726, 7
          %v728 = vsub.s32 %v629, %v727
          %v729 = vrot.slane %v460, %v728
          %v730 = vsel %vm634, %v729, %v725
          %v731 = vlaneseq
          %v732 = vshrl.u32 %v731, 7
          %v733 = vsub.s32 %v610, %v732
          %v734 = vrot.slane %v462, %v733
          %v735 = vlaneseq
          %v736 = vshrl.u32 %v735, 7
          %v737 = vsub.s32 %v615, %v736
          %v738 = vrot.slane %v464, %v737
          %v739 = vsel %vm620, %v738, %v734
          %v740 = vlaneseq
          %v741 = vshrl.u32 %v740, 7
          %v742 = vsub.s32 %v622, %v741
          %v743 = vrot.slane %v466, %v742
          %v744 = vsel %vm627, %v743, %v739
          %v745 = vlaneseq
          %v746 = vshrl.u32 %v745, 7
          %v747 = vsub.s32 %v629, %v746
          %v748 = vrot.slane %v468, %v747
          %v749 = vsel %vm634, %v748, %v744
          %v750 = vlaneseq
          %v751 = vshrl.u32 %v750, 7
          %v752 = vsub.s32 %v610, %v751
          %v753 = vrot.slane %v470, %v752
          %v754 = vlaneseq
          %v755 = vshrl.u32 %v754, 7
          %v756 = vsub.s32 %v615, %v755
          %v757 = vrot.slane %v472, %v756
          %v758 = vsel %vm620, %v757, %v753
          %v759 = vlaneseq
          %v760 = vshrl.u32 %v759, 7
          %v761 = vsub.s32 %v622, %v760
          %v762 = vrot.slane %v474, %v761
          %v763 = vsel %vm627, %v762, %v758
          %v764 = vlaneseq
          %v765 = vshrl.u32 %v764, 7
          %v766 = vsub.s32 %v629, %v765
          %v767 = vrot.slane %v476, %v766
          %v768 = vsel %vm634, %v767, %v763
          %v769 = vlaneseq
          %v770 = vshrl.u32 %v769, 7
          %v771 = vsub.s32 %v610, %v770
          %v772 = vrot.slane %v478, %v771
          %v773 = vlaneseq
          %v774 = vshrl.u32 %v773, 7
          %v775 = vsub.s32 %v615, %v774
          %v776 = vrot.slane %v480, %v775
          %v777 = vsel %vm620, %v776, %v772
          %v778 = vlaneseq
          %v779 = vshrl.u32 %v778, 7
          %v780 = vsub.s32 %v622, %v779
          %v781 = vrot.slane %v482, %v780
          %v782 = vsel %vm627, %v781, %v777
          %v783 = vlaneseq
          %v784 = vshrl.u32 %v783, 7
          %v785 = vsub.s32 %v629, %v784
          %v786 = vrot.slane %v484, %v785
          %v787 = vsel %vm634, %v786, %v782
          %v788 = vlaneseq
          %v789 = vshrl.u32 %v788, 7
          %v790 = vsub.s32 %v610, %v789
          %v791 = vrot.slane %v486, %v790
          %v792 = vlaneseq
          %v793 = vshrl.u32 %v792, 7
          %v794 = vsub.s32 %v615, %v793
          %v795 = vrot.slane %v488, %v794
          %v796 = vsel %vm620, %v795, %v791
          %v797 = vlaneseq
          %v798 = vshrl.u32 %v797, 7
          %v799 = vsub.s32 %v622, %v798
          %v800 = vrot.slane %v490, %v799
          %v801 = vsel %vm627, %v800, %v796
          %v802 = vlaneseq
          %v803 = vshrl.u32 %v802, 7
          %v804 = vsub.s32 %v629, %v803
          %v805 = vrot.slane %v492, %v804
          %v806 = vsel %vm634, %v805, %v801
          %v807 = vlaneseq
          %v808 = vshrl.u32 %v807, 7
          %v809 = vsub.s32 %v610, %v808
          %v810 = vrot.slane %v494, %v809
          %v811 = vlaneseq
          %v812 = vshrl.u32 %v811, 7
          %v813 = vsub.s32 %v615, %v812
          %v814 = vrot.slane %v496, %v813
          %v815 = vsel %vm620, %v814, %v810
          %v816 = vlaneseq
          %v817 = vshrl.u32 %v816, 7
          %v818 = vsub.s32 %v622, %v817
          %v819 = vrot.slane %v498, %v818
          %v820 = vsel %vm627, %v819, %v815
          %v821 = vlaneseq
          %v822 = vshrl.u32 %v821, 7
          %v823 = vsub.s32 %v629, %v822
          %v824 = vrot.slane %v500, %v823
          %v825 = vsel %vm634, %v824, %v820
          %v826 = vlaneseq
          %v827 = vshrl.u32 %v826, 7
          %v828 = vsub.s32 %v610, %v827
          %v829 = vrot.slane %v502, %v828
          %v830 = vlaneseq
          %v831 = vshrl.u32 %v830, 7
          %v832 = vsub.s32 %v615, %v831
          %v833 = vrot.slane %v504, %v832
          %v834 = vsel %vm620, %v833, %v829
          %v835 = vlaneseq
          %v836 = vshrl.u32 %v835, 7
          %v837 = vsub.s32 %v622, %v836
          %v838 = vrot.slane %v506, %v837
          %v839 = vsel %vm627, %v838, %v834
          %v840 = vlaneseq
          %v841 = vshrl.u32 %v840, 7
          %v842 = vsub.s32 %v629, %v841
          %v843 = vrot.slane %v508, %v842
          %v844 = vsel %vm634, %v843, %v839
          %v845 = vlaneseq
          %v846 = vshrl.u32 %v845, 7
          %v847 = vsub.s32 %v610, %v846
          %v848 = vrot.slane %v510, %v847
          %v849 = vlaneseq
          %v850 = vshrl.u32 %v849, 7
          %v851 = vsub.s32 %v615, %v850
          %v852 = vrot.slane %v512, %v851
          %v853 = vsel %vm620, %v852, %v848
          %v854 = vlaneseq
          %v855 = vshrl.u32 %v854, 7
          %v856 = vsub.s32 %v622, %v855
          %v857 = vrot.slane %v514, %v856
          %v858 = vsel %vm627, %v857, %v853
          %v859 = vlaneseq
          %v860 = vshrl.u32 %v859, 7
          %v861 = vsub.s32 %v629, %v860
          %v862 = vrot.slane %v516, %v861
          %v863 = vsel %vm634, %v862, %v858
          %v864 = vlaneseq
          %v865 = vshrl.u32 %v864, 7
          %v866 = vsub.s32 %v610, %v865
          %v867 = vrot.slane %v518, %v866
          %v868 = vlaneseq
          %v869 = vshrl.u32 %v868, 7
          %v870 = vsub.s32 %v615, %v869
          %v871 = vrot.slane %v520, %v870
          %v872 = vsel %vm620, %v871, %v867
          %v873 = vlaneseq
          %v874 = vshrl.u32 %v873, 7
          %v875 = vsub.s32 %v622, %v874
          %v876 = vrot.slane %v522, %v875
          %v877 = vsel %vm627, %v876, %v872
          %v878 = vlaneseq
          %v879 = vshrl.u32 %v878, 7
          %v880 = vsub.s32 %v629, %v879
          %v881 = vrot.slane %v524, %v880
          %v882 = vsel %vm634, %v881, %v877
          %v883 = vlaneseq
          %v884 = vshrl.u32 %v883, 7
          %v885 = vsub.s32 %v610, %v884
          %v886 = vrot.slane %v526, %v885
          %v887 = vlaneseq
          %v888 = vshrl.u32 %v887, 7
          %v889 = vsub.s32 %v615, %v888
          %v890 = vrot.slane %v528, %v889
          %v891 = vsel %vm620, %v890, %v886
          %v892 = vlaneseq
          %v893 = vshrl.u32 %v892, 7
          %v894 = vsub.s32 %v622, %v893
          %v895 = vrot.slane %v530, %v894
          %v896 = vsel %vm627, %v895, %v891
          %v897 = vlaneseq
          %v898 = vshrl.u32 %v897, 7
          %v899 = vsub.s32 %v629, %v898
          %v900 = vrot.slane %v532, %v899
          %v901 = vsel %vm634, %v900, %v896
          %v902 = vlaneseq
          %v903 = vshrl.u32 %v902, 7
          %v904 = vsub.s32 %v610, %v903
          %v905 = vrot.slane %v534, %v904
          %v906 = vlaneseq
          %v907 = vshrl.u32 %v906, 7
          %v908 = vsub.s32 %v615, %v907
          %v909 = vrot.slane %v536, %v908
          %v910 = vsel %vm620, %v909, %v905
          %v911 = vlaneseq
          %v912 = vshrl.u32 %v911, 7
          %v913 = vsub.s32 %v622, %v912
          %v914 = vrot.slane %v538, %v913
          %v915 = vsel %vm627, %v914, %v910
          %v916 = vlaneseq
          %v917 = vshrl.u32 %v916, 7
          %v918 = vsub.s32 %v629, %v917
          %v919 = vrot.slane %v540, %v918
          %v920 = vsel %vm634, %v919, %v915
          %vm921 = vcmask 1041409
          %v922 = vsel %vm921, %v654, %v635
          %vm923 = vcmask 1042434
          %v924 = vsel %vm923, %v673, %v922
          %vm925 = vcmask 1043459
          %v926 = vsel %vm925, %v692, %v924
          %vm927 = vcmask 1044484
          %v928 = vsel %vm927, %v711, %v926
          %vm929 = vcmask 1045509
          %v930 = vsel %vm929, %v730, %v928
          %vm931 = vcmask 1046534
          %v932 = vsel %vm931, %v749, %v930
          %vm933 = vcmask 1047559
          %v934 = vsel %vm933, %v768, %v932
          %v935 = vsel %vm921, %v806, %v787
          %v936 = vsel %vm923, %v825, %v935
          %v937 = vsel %vm925, %v844, %v936
          %v938 = vsel %vm927, %v863, %v937
          %v939 = vsel %vm929, %v882, %v938
          %v940 = vsel %vm931, %v901, %v939
          %v941 = vsel %vm933, %v920, %v940
          %vm944 = vcmask 261120
          %945 = vst.msk [vmem:[#allocation2] sm:$0xff] %vm944, %v934
          %946 = vst.msk [vmem:[#allocation2 + $0x8] sm:$0xff] %vm944, %v941
        $region56: #{tpu_custom_call.1} parent=39 // pred_fallthru
          _
        %p947 = scmp.gt.s32.totalorder %s23, 0
        // Predicated region
        $region57: #{tpu_custom_call.1} parent=39 // pred_check
          %p948 = pneg %p947
        $region58: #{tpu_custom_call.1} parent=39 // pred_check_branch
          %950 = sbr.rel (%p948) target = $region60
        $region59: #{tpu_custom_call.1} parent=39 // pred_region
          %v951 = vld [vmem:[#allocation2] sm:$0xff]
          %v952 = vld [vmem:[#allocation2 + $0x8] sm:$0xff]
          %v1017 = vlaneseq
          %v1018 = vand.u32 %v1017, 127
          %v1019 = vlaneseq
          %v1020 = vshrl.u32 %v1019, 7
          %v1021 = vsub.s32 %v1018, %v1020
          %v1022 = vrot.slane %v414, %v1021
          %v1023 = vadd.s32 %v1018, 4294967288
          %v1024 = vlaneseq
          %v1025 = vshrl.u32 %v1024, 7
          %v1026 = vsub.s32 %v1023, %v1025
          %v1027 = vrot.slane %v416, %v1026
          %vm1028 = vcmask 130112
          %v1029 = vsel %vm1028, %v1027, %v1022
          %v1030 = vadd.s32 %v1018, 4294967280
          %v1031 = vlaneseq
          %v1032 = vshrl.u32 %v1031, 7
          %v1033 = vsub.s32 %v1030, %v1032
          %v1034 = vrot.slane %v418, %v1033
          %vm1035 = vcmask 195712
          %v1036 = vsel %vm1035, %v1034, %v1029
          %v1037 = vadd.s32 %v1018, 4294967272
          %v1038 = vlaneseq
          %v1039 = vshrl.u32 %v1038, 7
          %v1040 = vsub.s32 %v1037, %v1039
          %v1041 = vrot.slane %v420, %v1040
          %vm1042 = vcmask 261312
          %v1043 = vsel %vm1042, %v1041, %v1036
          %v1044 = vlaneseq
          %v1045 = vshrl.u32 %v1044, 7
          %v1046 = vsub.s32 %v1018, %v1045
          %v1047 = vrot.slane %v422, %v1046
          %v1048 = vlaneseq
          %v1049 = vshrl.u32 %v1048, 7
          %v1050 = vsub.s32 %v1023, %v1049
          %v1051 = vrot.slane %v424, %v1050
          %v1052 = vsel %vm1028, %v1051, %v1047
          %v1053 = vlaneseq
          %v1054 = vshrl.u32 %v1053, 7
          %v1055 = vsub.s32 %v1030, %v1054
          %v1056 = vrot.slane %v426, %v1055
          %v1057 = vsel %vm1035, %v1056, %v1052
          %v1058 = vlaneseq
          %v1059 = vshrl.u32 %v1058, 7
          %v1060 = vsub.s32 %v1037, %v1059
          %v1061 = vrot.slane %v428, %v1060
          %v1062 = vsel %vm1042, %v1061, %v1057
          %v1063 = vlaneseq
          %v1064 = vshrl.u32 %v1063, 7
          %v1065 = vsub.s32 %v1018, %v1064
          %v1066 = vrot.slane %v430, %v1065
          %v1067 = vlaneseq
          %v1068 = vshrl.u32 %v1067, 7
          %v1069 = vsub.s32 %v1023, %v1068
          %v1070 = vrot.slane %v432, %v1069
          %v1071 = vsel %vm1028, %v1070, %v1066
          %v1072 = vlaneseq
          %v1073 = vshrl.u32 %v1072, 7
          %v1074 = vsub.s32 %v1030, %v1073
          %v1075 = vrot.slane %v434, %v1074
          %v1076 = vsel %vm1035, %v1075, %v1071
          %v1077 = vlaneseq
          %v1078 = vshrl.u32 %v1077, 7
          %v1079 = vsub.s32 %v1037, %v1078
          %v1080 = vrot.slane %v436, %v1079
          %v1081 = vsel %vm1042, %v1080, %v1076
          %v1082 = vlaneseq
          %v1083 = vshrl.u32 %v1082, 7
          %v1084 = vsub.s32 %v1018, %v1083
          %v1085 = vrot.slane %v438, %v1084
          %v1086 = vlaneseq
          %v1087 = vshrl.u32 %v1086, 7
          %v1088 = vsub.s32 %v1023, %v1087
          %v1089 = vrot.slane %v440, %v1088
          %v1090 = vsel %vm1028, %v1089, %v1085
          %v1091 = vlaneseq
          %v1092 = vshrl.u32 %v1091, 7
          %v1093 = vsub.s32 %v1030, %v1092
          %v1094 = vrot.slane %v442, %v1093
          %v1095 = vsel %vm1035, %v1094, %v1090
          %v1096 = vlaneseq
          %v1097 = vshrl.u32 %v1096, 7
          %v1098 = vsub.s32 %v1037, %v1097
          %v1099 = vrot.slane %v444, %v1098
          %v1100 = vsel %vm1042, %v1099, %v1095
          %v1101 = vlaneseq
          %v1102 = vshrl.u32 %v1101, 7
          %v1103 = vsub.s32 %v1018, %v1102
          %v1104 = vrot.slane %v446, %v1103
          %v1105 = vlaneseq
          %v1106 = vshrl.u32 %v1105, 7
          %v1107 = vsub.s32 %v1023, %v1106
          %v1108 = vrot.slane %v448, %v1107
          %v1109 = vsel %vm1028, %v1108, %v1104
          %v1110 = vlaneseq
          %v1111 = vshrl.u32 %v1110, 7
          %v1112 = vsub.s32 %v1030, %v1111
          %v1113 = vrot.slane %v450, %v1112
          %v1114 = vsel %vm1035, %v1113, %v1109
          %v1115 = vlaneseq
          %v1116 = vshrl.u32 %v1115, 7
          %v1117 = vsub.s32 %v1037, %v1116
          %v1118 = vrot.slane %v452, %v1117
          %v1119 = vsel %vm1042, %v1118, %v1114
          %v1120 = vlaneseq
          %v1121 = vshrl.u32 %v1120, 7
          %v1122 = vsub.s32 %v1018, %v1121
          %v1123 = vrot.slane %v454, %v1122
          %v1124 = vlaneseq
          %v1125 = vshrl.u32 %v1124, 7
          %v1126 = vsub.s32 %v1023, %v1125
          %v1127 = vrot.slane %v456, %v1126
          %v1128 = vsel %vm1028, %v1127, %v1123
          %v1129 = vlaneseq
          %v1130 = vshrl.u32 %v1129, 7
          %v1131 = vsub.s32 %v1030, %v1130
          %v1132 = vrot.slane %v458, %v1131
          %v1133 = vsel %vm1035, %v1132, %v1128
          %v1134 = vlaneseq
          %v1135 = vshrl.u32 %v1134, 7
          %v1136 = vsub.s32 %v1037, %v1135
          %v1137 = vrot.slane %v460, %v1136
          %v1138 = vsel %vm1042, %v1137, %v1133
          %v1139 = vlaneseq
          %v1140 = vshrl.u32 %v1139, 7
          %v1141 = vsub.s32 %v1018, %v1140
          %v1142 = vrot.slane %v462, %v1141
          %v1143 = vlaneseq
          %v1144 = vshrl.u32 %v1143, 7
          %v1145 = vsub.s32 %v1023, %v1144
          %v1146 = vrot.slane %v464, %v1145
          %v1147 = vsel %vm1028, %v1146, %v1142
          %v1148 = vlaneseq
          %v1149 = vshrl.u32 %v1148, 7
          %v1150 = vsub.s32 %v1030, %v1149
          %v1151 = vrot.slane %v466, %v1150
          %v1152 = vsel %vm1035, %v1151, %v1147
          %v1153 = vlaneseq
          %v1154 = vshrl.u32 %v1153, 7
          %v1155 = vsub.s32 %v1037, %v1154
          %v1156 = vrot.slane %v468, %v1155
          %v1157 = vsel %vm1042, %v1156, %v1152
          %v1158 = vlaneseq
          %v1159 = vshrl.u32 %v1158, 7
          %v1160 = vsub.s32 %v1018, %v1159
          %v1161 = vrot.slane %v470, %v1160
          %v1162 = vlaneseq
          %v1163 = vshrl.u32 %v1162, 7
          %v1164 = vsub.s32 %v1023, %v1163
          %v1165 = vrot.slane %v472, %v1164
          %v1166 = vsel %vm1028, %v1165, %v1161
          %v1167 = vlaneseq
          %v1168 = vshrl.u32 %v1167, 7
          %v1169 = vsub.s32 %v1030, %v1168
          %v1170 = vrot.slane %v474, %v1169
          %v1171 = vsel %vm1035, %v1170, %v1166
          %v1172 = vlaneseq
          %v1173 = vshrl.u32 %v1172, 7
          %v1174 = vsub.s32 %v1037, %v1173
          %v1175 = vrot.slane %v476, %v1174
          %v1176 = vsel %vm1042, %v1175, %v1171
          %v1177 = vlaneseq
          %v1178 = vshrl.u32 %v1177, 7
          %v1179 = vsub.s32 %v1018, %v1178
          %v1180 = vrot.slane %v478, %v1179
          %v1181 = vlaneseq
          %v1182 = vshrl.u32 %v1181, 7
          %v1183 = vsub.s32 %v1023, %v1182
          %v1184 = vrot.slane %v480, %v1183
          %v1185 = vsel %vm1028, %v1184, %v1180
          %v1186 = vlaneseq
          %v1187 = vshrl.u32 %v1186, 7
          %v1188 = vsub.s32 %v1030, %v1187
          %v1189 = vrot.slane %v482, %v1188
          %v1190 = vsel %vm1035, %v1189, %v1185
          %v1191 = vlaneseq
          %v1192 = vshrl.u32 %v1191, 7
          %v1193 = vsub.s32 %v1037, %v1192
          %v1194 = vrot.slane %v484, %v1193
          %v1195 = vsel %vm1042, %v1194, %v1190
          %v1196 = vlaneseq
          %v1197 = vshrl.u32 %v1196, 7
          %v1198 = vsub.s32 %v1018, %v1197
          %v1199 = vrot.slane %v486, %v1198
          %v1200 = vlaneseq
          %v1201 = vshrl.u32 %v1200, 7
          %v1202 = vsub.s32 %v1023, %v1201
          %v1203 = vrot.slane %v488, %v1202
          %v1204 = vsel %vm1028, %v1203, %v1199
          %v1205 = vlaneseq
          %v1206 = vshrl.u32 %v1205, 7
          %v1207 = vsub.s32 %v1030, %v1206
          %v1208 = vrot.slane %v490, %v1207
          %v1209 = vsel %vm1035, %v1208, %v1204
          %v1210 = vlaneseq
          %v1211 = vshrl.u32 %v1210, 7
          %v1212 = vsub.s32 %v1037, %v1211
          %v1213 = vrot.slane %v492, %v1212
          %v1214 = vsel %vm1042, %v1213, %v1209
          %v1215 = vlaneseq
          %v1216 = vshrl.u32 %v1215, 7
          %v1217 = vsub.s32 %v1018, %v1216
          %v1218 = vrot.slane %v494, %v1217
          %v1219 = vlaneseq
          %v1220 = vshrl.u32 %v1219, 7
          %v1221 = vsub.s32 %v1023, %v1220
          %v1222 = vrot.slane %v496, %v1221
          %v1223 = vsel %vm1028, %v1222, %v1218
          %v1224 = vlaneseq
          %v1225 = vshrl.u32 %v1224, 7
          %v1226 = vsub.s32 %v1030, %v1225
          %v1227 = vrot.slane %v498, %v1226
          %v1228 = vsel %vm1035, %v1227, %v1223
          %v1229 = vlaneseq
          %v1230 = vshrl.u32 %v1229, 7
          %v1231 = vsub.s32 %v1037, %v1230
          %v1232 = vrot.slane %v500, %v1231
          %v1233 = vsel %vm1042, %v1232, %v1228
          %v1234 = vlaneseq
          %v1235 = vshrl.u32 %v1234, 7
          %v1236 = vsub.s32 %v1018, %v1235
          %v1237 = vrot.slane %v502, %v1236
          %v1238 = vlaneseq
          %v1239 = vshrl.u32 %v1238, 7
          %v1240 = vsub.s32 %v1023, %v1239
          %v1241 = vrot.slane %v504, %v1240
          %v1242 = vsel %vm1028, %v1241, %v1237
          %v1243 = vlaneseq
          %v1244 = vshrl.u32 %v1243, 7
          %v1245 = vsub.s32 %v1030, %v1244
          %v1246 = vrot.slane %v506, %v1245
          %v1247 = vsel %vm1035, %v1246, %v1242
          %v1248 = vlaneseq
          %v1249 = vshrl.u32 %v1248, 7
          %v1250 = vsub.s32 %v1037, %v1249
          %v1251 = vrot.slane %v508, %v1250
          %v1252 = vsel %vm1042, %v1251, %v1247
          %v1253 = vlaneseq
          %v1254 = vshrl.u32 %v1253, 7
          %v1255 = vsub.s32 %v1018, %v1254
          %v1256 = vrot.slane %v510, %v1255
          %v1257 = vlaneseq
          %v1258 = vshrl.u32 %v1257, 7
          %v1259 = vsub.s32 %v1023, %v1258
          %v1260 = vrot.slane %v512, %v1259
          %v1261 = vsel %vm1028, %v1260, %v1256
          %v1262 = vlaneseq
          %v1263 = vshrl.u32 %v1262, 7
          %v1264 = vsub.s32 %v1030, %v1263
          %v1265 = vrot.slane %v514, %v1264
          %v1266 = vsel %vm1035, %v1265, %v1261
          %v1267 = vlaneseq
          %v1268 = vshrl.u32 %v1267, 7
          %v1269 = vsub.s32 %v1037, %v1268
          %v1270 = vrot.slane %v516, %v1269
          %v1271 = vsel %vm1042, %v1270, %v1266
          %v1272 = vlaneseq
          %v1273 = vshrl.u32 %v1272, 7
          %v1274 = vsub.s32 %v1018, %v1273
          %v1275 = vrot.slane %v518, %v1274
          %v1276 = vlaneseq
          %v1277 = vshrl.u32 %v1276, 7
          %v1278 = vsub.s32 %v1023, %v1277
          %v1279 = vrot.slane %v520, %v1278
          %v1280 = vsel %vm1028, %v1279, %v1275
          %v1281 = vlaneseq
          %v1282 = vshrl.u32 %v1281, 7
          %v1283 = vsub.s32 %v1030, %v1282
          %v1284 = vrot.slane %v522, %v1283
          %v1285 = vsel %vm1035, %v1284, %v1280
          %v1286 = vlaneseq
          %v1287 = vshrl.u32 %v1286, 7
          %v1288 = vsub.s32 %v1037, %v1287
          %v1289 = vrot.slane %v524, %v1288
          %v1290 = vsel %vm1042, %v1289, %v1285
          %v1291 = vlaneseq
          %v1292 = vshrl.u32 %v1291, 7
          %v1293 = vsub.s32 %v1018, %v1292
          %v1294 = vrot.slane %v526, %v1293
          %v1295 = vlaneseq
          %v1296 = vshrl.u32 %v1295, 7
          %v1297 = vsub.s32 %v1023, %v1296
          %v1298 = vrot.slane %v528, %v1297
          %v1299 = vsel %vm1028, %v1298, %v1294
          %v1300 = vlaneseq
          %v1301 = vshrl.u32 %v1300, 7
          %v1302 = vsub.s32 %v1030, %v1301
          %v1303 = vrot.slane %v530, %v1302
          %v1304 = vsel %vm1035, %v1303, %v1299
          %v1305 = vlaneseq
          %v1306 = vshrl.u32 %v1305, 7
          %v1307 = vsub.s32 %v1037, %v1306
          %v1308 = vrot.slane %v532, %v1307
          %v1309 = vsel %vm1042, %v1308, %v1304
          %v1310 = vlaneseq
          %v1311 = vshrl.u32 %v1310, 7
          %v1312 = vsub.s32 %v1018, %v1311
          %v1313 = vrot.slane %v534, %v1312
          %v1314 = vlaneseq
          %v1315 = vshrl.u32 %v1314, 7
          %v1316 = vsub.s32 %v1023, %v1315
          %v1317 = vrot.slane %v536, %v1316
          %v1318 = vsel %vm1028, %v1317, %v1313
          %v1319 = vlaneseq
          %v1320 = vshrl.u32 %v1319, 7
          %v1321 = vsub.s32 %v1030, %v1320
          %v1322 = vrot.slane %v538, %v1321
          %v1323 = vsel %vm1035, %v1322, %v1318
          %v1324 = vlaneseq
          %v1325 = vshrl.u32 %v1324, 7
          %v1326 = vsub.s32 %v1037, %v1325
          %v1327 = vrot.slane %v540, %v1326
          %v1328 = vsel %vm1042, %v1327, %v1323
          %vm1329 = vcmask 1041409
          %v1330 = vsel %vm1329, %v1062, %v1043
          %vm1331 = vcmask 1042434
          %v1332 = vsel %vm1331, %v1081, %v1330
          %vm1333 = vcmask 1043459
          %v1334 = vsel %vm1333, %v1100, %v1332
          %vm1335 = vcmask 1044484
          %v1336 = vsel %vm1335, %v1119, %v1334
          %vm1337 = vcmask 1045509
          %v1338 = vsel %vm1337, %v1138, %v1336
          %vm1339 = vcmask 1046534
          %v1340 = vsel %vm1339, %v1157, %v1338
          %vm1341 = vcmask 1047559
          %v1342 = vsel %vm1341, %v1176, %v1340
          %v1343 = vsel %vm1329, %v1214, %v1195
          %v1344 = vsel %vm1331, %v1233, %v1343
          %v1345 = vsel %vm1333, %v1252, %v1344
          %v1346 = vsel %vm1335, %v1271, %v1345
          %v1347 = vsel %vm1337, %v1290, %v1346
          %v1348 = vsel %vm1339, %v1309, %v1347
          %v1349 = vsel %vm1341, %v1328, %v1348
          %v1352 = vadd.f32 %v951, %v1342
          %v1353 = vadd.f32 %v952, %v1349
          %vm1354 = vcmask 261120
          %1355 = vst.msk [vmem:[#allocation2] sm:$0xff] %vm1354, %v1352
          %1356 = vst.msk [vmem:[#allocation2 + $0x8] sm:$0xff] %vm1354, %v1353
        $region60: #{tpu_custom_call.1} parent=39 // pred_fallthru
          _
        %p1357 = scmp.eq.s32.totalorder %s23, 3
        // Predicated region
        $region61: #{tpu_custom_call.1} parent=39 // pred_check
          %p1358 = pneg %p1357
        $region62: #{tpu_custom_call.1} parent=39 // pred_check_branch
          %1360 = sbr.rel (%p1358) target = $region64
        $region63: #{tpu_custom_call.1} parent=39 // pred_region
          %v1361 = vld [vmem:[%s3] sm:$0x1]
          %v1362 = vld [vmem:[#allocation8] sm:$0xff]
          %v1363 = vld [vmem:[#allocation8 + $0x8] sm:$0xff]
          %vm1364 = vcmask 130048
          %v1366 = vsel %vm1364, %v1361, 0
          %v1369 = vsel %vm1364, %v1362, 0
          %v1372 = vsel %vm1364, %v1363, 0
          %1374 = vmatprep.subr.mxu0 0.0
          %1375 = vmatpush1.xpose.msra.mxu0 %v1369
          %1376 = vmatprep.subr.mxu0 0.0
          %1377 = vmatpush1.xpose.msra.mxu0 %v1372
          %1378 = vmatprep.subr.mxu0 0.0
          %1379 = vmatpush1.xpose.msra.mxu0 0.0
          %1380 = vmatprep.subr.mxu0 0.0
          %1381 = vmatpush1.xpose.msra.mxu0 0.0
          %1382 = vmatprep.subr.mxu0 0.0
          %1383 = vmatpush1.xpose.msra.mxu0 0.0
          %1384 = vmatprep.subr.mxu0 0.0
          %1385 = vmatpush1.xpose.msra.mxu0 0.0
          %1386 = vmatprep.subr.mxu0 0.0
          %1387 = vmatpush1.xpose.msra.mxu0 0.0
          %1388 = vmatprep.subr.mxu0 0.0
          %1389 = vmatpush1.xpose.msra.mxu0 0.0
          %1390 = vmatprep.subr.mxu0 0.0
          %1391 = vmatpush1.xpose.msra.mxu0 0.0
          %1392 = vmatprep.subr.mxu0 0.0
          %1393 = vmatpush1.xpose.msra.mxu0 0.0
          %1394 = vmatprep.subr.mxu0 0.0
          %1395 = vmatpush1.xpose.msra.mxu0 0.0
          %1396 = vmatprep.subr.mxu0 0.0
          %1397 = vmatpush1.xpose.msra.mxu0 0.0
          %1398 = vmatprep.subr.mxu0 0.0
          %1399 = vmatpush1.xpose.msra.mxu0 0.0
          %1400 = vmatprep.subr.mxu0 0.0
          %1401 = vmatpush1.xpose.msra.mxu0 0.0
          %1402 = vmatprep.subr.mxu0 0.0
          %1403 = vmatpush1.xpose.msra.mxu0 0.0
          %1404 = vmatprep.subr.mxu0 0.0
          %1405 = vmatpush1.xpose.msra.mxu0 0.0
          %1406 = vmatprep.subr.mxu0 0.0
          %1407 = vmatpush1.xpose.msra.mxu0 0.0
          %1408 = vmatprep.subr.mxu0 0.0
          %1409 = vmatpush1.xpose.msra.mxu0 0.0
          %1410 = vmatprep.subr.mxu0 0.0
          %1411 = vmatpush1.xpose.msra.mxu0 0.0
          %1412 = vmatprep.subr.mxu0 0.0
          %1413 = vmatpush1.xpose.msra.mxu0 0.0
          %1414 = vmatprep.subr.mxu0 0.0
          %1415 = vmatpush1.xpose.msra.mxu0 0.0
          %1416 = vmatprep.subr.mxu0 0.0
          %1417 = vmatpush1.xpose.msra.mxu0 0.0
          %1418 = vmatprep.subr.mxu0 0.0
          %1419 = vmatpush1.xpose.msra.mxu0 0.0
          %1420 = vmatprep.subr.mxu0 0.0
          %1421 = vmatpush1.xpose.msra.mxu0 0.0
          %1422 = vmatprep.subr.mxu0 0.0
          %1423 = vmatpush1.xpose.msra.mxu0 0.0
          %1424 = vmatprep.subr.mxu0 0.0
          %1425 = vmatpush1.xpose.msra.mxu0 0.0
          %1426 = vmatprep.subr.mxu0 0.0
          %1427 = vmatpush1.xpose.msra.mxu0 0.0
          %1428 = vmatprep.subr.mxu0 0.0
          %1429 = vmatpush1.xpose.msra.mxu0 0.0
          %1430 = vmatprep.subr.mxu0 0.0
          %1431 = vmatpush1.xpose.msra.mxu0 0.0
          %1432 = vmatprep.subr.mxu0 0.0
          %1433 = vmatpush1.xpose.msra.mxu0 0.0
          %1434 = vmatprep.subr.mxu0 0.0
          %1435 = vmatpush1.xpose.msra.mxu0 0.0
          %1436 = vmatprep.subr.mxu0 0.0
          %1437 = vmatpush1.xpose.msra.mxu0 0.0
          %1438 = vmatprep.mubr.f32.mxu0 0.0
          %1439 = vmatmul.mubr.f32.gmra.mrb[0].mxu0 %v1366
          %v1440 = vpop.f32.mrb[0].mxu0
          %v1441 = vadd.f32 0.0, %v1440
          %v1442 = vpop.f32.mrb[0].mxu0
          %1443 = vdwg.mxu0
          %v1444 = vld [vmem:[%s4] sm:$0xff]
          %v1445 = vld [vmem:[#allocation2] sm:$0xff]
          %v1446 = vld [vmem:[#allocation2 + $0x8] sm:$0xff]
          %v1447 = vlaneseq
          %v1448 = vshrl.u32 %v1447, 7
          %v1449 = vsub.s32 0, %v1448
          %v1450 = vrot.slane %v1441, %v1449
          %vm1451 = vcmask 261120
          %v1453 = vsel %vm1451, %v1444, 0
          %v1456 = vsel %vm1451, %v1445, 0
          %v1459 = vsel %vm1451, %v1446, 0
          %1461 = vmatprep.subr.mxu0 0.0
          %1462 = vmatpush1.xpose.msra.mxu0 %v1456
          %1463 = vmatprep.subr.mxu0 0.0
          %1464 = vmatpush1.xpose.msra.mxu0 %v1459
          %1465 = vmatprep.subr.mxu0 0.0
          %1466 = vmatpush1.xpose.msra.mxu0 0.0
          %1467 = vmatprep.subr.mxu0 0.0
          %1468 = vmatpush1.xpose.msra.mxu0 0.0
          %1469 = vmatprep.subr.mxu0 0.0
          %1470 = vmatpush1.xpose.msra.mxu0 0.0
          %1471 = vmatprep.subr.mxu0 0.0
          %1472 = vmatpush1.xpose.msra.mxu0 0.0
          %1473 = vmatprep.subr.mxu0 0.0
          %1474 = vmatpush1.xpose.msra.mxu0 0.0
          %1475 = vmatprep.subr.mxu0 0.0
          %1476 = vmatpush1.xpose.msra.mxu0 0.0
          %1477 = vmatprep.subr.mxu0 0.0
          %1478 = vmatpush1.xpose.msra.mxu0 0.0
          %1479 = vmatprep.subr.mxu0 0.0
          %1480 = vmatpush1.xpose.msra.mxu0 0.0
          %1481 = vmatprep.subr.mxu0 0.0
          %1482 = vmatpush1.xpose.msra.mxu0 0.0
          %1483 = vmatprep.subr.mxu0 0.0
          %1484 = vmatpush1.xpose.msra.mxu0 0.0
          %1485 = vmatprep.subr.mxu0 0.0
          %1486 = vmatpush1.xpose.msra.mxu0 0.0
          %1487 = vmatprep.subr.mxu0 0.0
          %1488 = vmatpush1.xpose.msra.mxu0 0.0
          %1489 = vmatprep.subr.mxu0 0.0
          %1490 = vmatpush1.xpose.msra.mxu0 0.0
          %1491 = vmatprep.subr.mxu0 0.0
          %1492 = vmatpush1.xpose.msra.mxu0 0.0
          %1493 = vmatprep.subr.mxu0 0.0
          %1494 = vmatpush1.xpose.msra.mxu0 0.0
          %1495 = vmatprep.subr.mxu0 0.0
          %1496 = vmatpush1.xpose.msra.mxu0 0.0
          %1497 = vmatprep.subr.mxu0 0.0
          %1498 = vmatpush1.xpose.msra.mxu0 0.0
          %1499 = vmatprep.subr.mxu0 0.0
          %1500 = vmatpush1.xpose.msra.mxu0 0.0
          %1501 = vmatprep.subr.mxu0 0.0
          %1502 = vmatpush1.xpose.msra.mxu0 0.0
          %1503 = vmatprep.subr.mxu0 0.0
          %1504 = vmatpush1.xpose.msra.mxu0 0.0
          %1505 = vmatprep.subr.mxu0 0.0
          %1506 = vmatpush1.xpose.msra.mxu0 0.0
          %1507 = vmatprep.subr.mxu0 0.0
          %1508 = vmatpush1.xpose.msra.mxu0 0.0
          %1509 = vmatprep.subr.mxu0 0.0
          %1510 = vmatpush1.xpose.msra.mxu0 0.0
          %1511 = vmatprep.subr.mxu0 0.0
          %1512 = vmatpush1.xpose.msra.mxu0 0.0
          %1513 = vmatprep.subr.mxu0 0.0
          %1514 = vmatpush1.xpose.msra.mxu0 0.0
          %1515 = vmatprep.subr.mxu0 0.0
          %1516 = vmatpush1.xpose.msra.mxu0 0.0
          %1517 = vmatprep.subr.mxu0 0.0
          %1518 = vmatpush1.xpose.msra.mxu0 0.0
          %1519 = vmatprep.subr.mxu0 0.0
          %1520 = vmatpush1.xpose.msra.mxu0 0.0
          %1521 = vmatprep.subr.mxu0 0.0
          %1522 = vmatpush1.xpose.msra.mxu0 0.0
          %1523 = vmatprep.subr.mxu0 0.0
          %1524 = vmatpush1.xpose.msra.mxu0 0.0
          %1525 = vmatprep.mubr.f32.mxu0 0.0
          %1526 = vmatmul.mubr.f32.gmra.mrb[0].mxu0 %v1453
          %v1527 = vpop.f32.mrb[0].mxu0
          %v1528 = vadd.f32 %v1450, %v1527
          %v1529 = vpop.f32.mrb[0].mxu0
          %1530 = vdwg.mxu0
          %1531 = vst.msk [vmem:[#allocation9] sm:$0xff] %vm1364, %v1528
        $region64: #{tpu_custom_call.1} parent=39 // pred_fallthru
          _
        // Predicated region
        $region65: #{tpu_custom_call.1} parent=39 // pred_check
          %p1532 = pneg %p151
        $region66: #{tpu_custom_call.1} parent=39 // pred_check_branch
          %1534 = sbr.rel (%p1532) target = $region68
        $region67: #{tpu_custom_call.1} parent=39 // pred_region
          %s1536 = ssub.s32 128, 128
          %1537 = vsyncadd [#allocation5], %s1536
          %s1539 = sshll.u32 [#allocation9], 4
          %s1540 = int_to_ptr.vmem [resolvable:$true] %s1539
          %1542 = dma.vmem_to_hbm [thread:$0]  %s1540, 128, %s5, [#allocation5]
        $region68: #{tpu_custom_call.1} parent=39 // pred_fallthru
          _
        // Predicated region
        $region69: #{tpu_custom_call.1} parent=39 // pred_check
          %p1543 = pneg %p151
        $region70: #{tpu_custom_call.1} parent=39 // pred_check_branch
          %1545 = sbr.rel (%p1543) target = $region72
        $region71: #{tpu_custom_call.1} parent=39 // pred_region
          %1546 = dma.done [#allocation5], 128
        $region72: #{tpu_custom_call.1} parent=39 // pred_fallthru
          _
      $region40: #{tpu_custom_call.1} parent=5 // pred_fallthru
        _
      %p1547 = scmp.le.s32.totalorder 2, %s18
      // Predicated region
      $region73: #{tpu_custom_call.1} parent=5 // pred_check
        %p1548 = pneg %p1547
      $region74: #{tpu_custom_call.1} parent=5 // pred_check_branch
        %1550 = sbr.rel (%p1548) target = $region76
      $region75: #{tpu_custom_call.1} parent=5 // pred_region
        %s1551 = ssub.s32 %s18, 2
      $region76: #{tpu_custom_call.1} parent=5 // pred_fallthru
        _
    $region6: #{tpu_custom_call.1} parent=1 // loop_footer
      %s22 = sadd.s32 1, %s18
    $region7: #{tpu_custom_call.1} parent=1 // loop_footer_branch
      %17 = sbr.rel target = $region3
    $region8: #{tpu_custom_call.1} parent=1 // loop_exit
      _
    %1552 = vsyncpa [#allocation4], 1
    %s1553 = scalar_lea.sflag [#allocation4], 1
    %1554 = vsyncpa %s1553, 1
    %1555 = vsyncpa [#allocation7], 1
    %s1556 = scalar_lea.sflag [#allocation7], 1
    %1557 = vsyncpa %s1556, 1
    %1558 = vsyncpa [#allocation5], 1
    %s1559 = scalar_lea.sflag [#allocation5], 1
    %1560 = vsyncpa %s1559, 1

</llo_original>
